<compile_context>
chip_gen: v5e
topology: v5e:2x2
jax: 0.10.0
libtpu: 0.0.40
codegen_flags: <defaults>
</compile_context>

<pallas_src>
import jax
import jax.numpy as jnp
from jax.experimental import pallas as pl
from jax.experimental.pallas import tpu as pltpu


def _round_up(x: int, m: int) -> int:
    return (x + m - 1) // m * m


def _patch_proj_kernel(p_ref, w_ref, b_ref, o_ref):
    # p_ref: (tm, K)   flattened patch tile (compute dtype, e.g. bf16)
    # w_ref: (K, tn)   flattened conv weight tile (transposed)
    # b_ref: (1, tn)   bias tile (f32)
    # o_ref: (tm, tn)  projected patch tile
    acc = jnp.dot(p_ref[...], w_ref[...], preferred_element_type=jnp.float32)
    o_ref[...] = (acc + b_ref[...]).astype(o_ref.dtype)


def _vmem_capacity_bytes() -> int:
    """Per-core VMEM capacity; conservative (v7x) fallback if query fails."""
    try:
        return int(pltpu.get_tpu_info().vmem_capacity_bytes)
    except Exception:
        return 64 * 1024 * 1024


def patch_embed2_project(patches, w_flat, bias, *, out_dtype=None):
    """patches (M, K) @ w_flat (K, E) + bias (E,) -> (M, E) via Pallas GEMM.

    `patches` should already be in the desired MXU operand dtype (e.g. bf16).
    Accumulation and bias add are f32; output dtype defaults to patches.dtype.
    """
    M, K = patches.shape
    K2, E = w_flat.shape
    assert K2 == K, (K2, K)

    in_dt = jnp.dtype(patches.dtype)
    out_dt = jnp.dtype(out_dtype if out_dtype is not None else patches.dtype)
    in_bytes = in_dt.itemsize
    out_bytes = out_dt.itemsize

    w_flat = w_flat.astype(in_dt)                       # (K, E), tiny
    bias_2d = bias.astype(jnp.float32).reshape(1, E)    # f32 bias add

    sublane = 8 if in_bytes >= 4 else 16

    vmem_cap = _vmem_capacity_bytes()
    budget = (vmem_cap * 3) // 4          # leave headroom for compiler scratch

    # Keep the whole (K, E) weight resident (single-buffered) in VMEM when it
    # is small enough; otherwise tile E lane-dense.
    weight_bytes_full = K * E * in_bytes
    resident = weight_bytes_full <= min(16 * 1024 * 1024, budget // 3)
    if resident:
        tn, num_n = E, 1
    else:
        tn = 512
        num_n = pl.cdiv(E, tn)

    weight_vmem = weight_bytes_full if resident else 2 * K * tn * in_bytes
    bias_vmem = (1 if resident else 2) * tn * 4

    # Largest tm (multiple of `sublane`, capped at 2048) whose double-buffered
    # patch + output tiles fit next to the weight in the VMEM budget.
    per_row = 2 * K * in_bytes + 2 * tn * out_bytes
    tm = max(sublane, (budget - weight_vmem - bias_vmem) // max(per_row, 1))
    tm = min(tm, 2048, _round_up(M, sublane))
    tm = max(sublane, (tm // sublane) * sublane)
    num_m = pl.cdiv(M, tm)
    # v7x megacore: keep >= 2 M tiles so both TensorCores get work.
    if num_m == 1 and M >= 2 * sublane:
        tm = _round_up(pl.cdiv(M, 2), sublane)
        num_m = pl.cdiv(M, tm)

    patches_bytes = M * K * in_bytes

    # Grid ordering.  M-outer streams the (big) patch matrix exactly once but
    # re-reads the weight once per M tile; E-outer does the opposite.  Pick
    # whichever minimizes total HBM traffic (resident weight => M-outer).
    if resident or (weight_bytes_full * num_m <= patches_bytes * num_n):
        grid = (num_m, num_n)
        p_map = lambda i, j: (i, 0)
        w_map = lambda i, j: (0, j)
        b_map = lambda i, j: (0, j)
        o_map = lambda i, j: (i, j)
        weight_reads = 1 if resident else num_m
        patches_reads = 1
    else:
        grid = (num_n, num_m)
        p_map = lambda j, i: (i, 0)
        w_map = lambda j, i: (0, j)
        b_map = lambda j, i: (0, j)
        o_map = lambda j, i: (i, j)
        weight_reads = 1
        patches_reads = num_n

    # Grid-invariant weight / bias: single-buffered (no useless double-buffer).
    res_kwargs = dict(pipeline_mode=pl.Buffered(1)) if resident else {}
    in_specs = [
        pl.BlockSpec((tm, K), p_map),
        pl.BlockSpec((K, tn), w_map, **res_kwargs),
        pl.BlockSpec((1, tn), b_map, **res_kwargs),
    ]
    out_spec = pl.BlockSpec((tm, tn), o_map)

    vmem_est = (2 * tm * K * in_bytes        # patches, double-buffered
                + weight_vmem + bias_vmem    # weight/bias (1x if resident)
                + 2 * tm * tn * out_bytes)   # output, double-buffered
    vmem_limit = min(max(vmem_est + (4 << 20), 32 << 20), (vmem_cap * 9) // 10)
    vmem_limit = max(vmem_limit, vmem_est)

    cost = pl.CostEstimate(
        flops=2 * M * K * E,
        transcendentals=0,
        bytes_accessed=(patches_bytes * patches_reads
                        + weight_bytes_full * weight_reads
                        + E * 4 * weight_reads
                        + M * E * out_bytes),
    )

    return pl.pallas_call(
        _patch_proj_kernel,
        out_shape=jax.ShapeDtypeStruct((M, E), out_dt),
        grid=grid,
        in_specs=in_specs,
        out_specs=out_spec,
        compiler_params=pltpu.CompilerParams(
            dimension_semantics=("parallel", "parallel"),
            vmem_limit_bytes=int(vmem_limit),
        ),
        cost_estimate=cost,
    )(patches, w_flat, bias_2d)


def patch_embed2_forward(x, weight, bias, patch_size, *,
                         compute_dtype=jnp.bfloat16, channels_last=False):
    """Equivalent to PyTorch PatchEmbed2.forward.

    x:      (B, C, H, W)   NCHW input (PyTorch convention)
    weight: (E, C, p, p)   conv weight
    bias:   (E,)           conv bias
    compute_dtype: MXU operand dtype (default bf16; accumulation is f32;
                   pass jnp.float32 for exact conv numerics).
    channels_last: if True return (B, H//p, W//p, E) and skip the NCHW
                   transpose (fast path for transformer consumers);
                   default False returns (B, E, H//p, W//p) like the module.
    """
    B, C, H, W = x.shape
    E = weight.shape[0]
    p = patch_size
    assert H % p == 0 and W % p == 0
    Hp, Wp = H // p, W // p
    K = C * p * p
    out_dtype = x.dtype
    cdt = jnp.dtype(compute_dtype if compute_dtype is not None else x.dtype)

    # Patch extraction: the dim-splitting reshape is free; the transpose and
    # the dtype cast fuse into a single XLA copy that writes the patch matrix
    # at compute-dtype width.  (See module-level TODO about full fusion.)
    patches = (x.astype(cdt)
               .reshape(B, C, Hp, p, Wp, p)
               .transpose(0, 2, 4, 1, 3, 5)
               .reshape(B * Hp * Wp, K))

    w_flat = weight.reshape(E, K).T              # (K, E); tiny, order matches

    out2d = patch_embed2_project(patches, w_flat, bias, out_dtype=out_dtype)

    out = out2d.reshape(B, Hp, Wp, E)            # free reshape, channels-last
    if channels_last:
        return out
    # NCHW to match the PyTorch module (one extra HBM pass over the output).
    return out.transpose(0, 3, 1, 2)


if __name__ == "__main__":
    # Small shapes consistent with the module:
    #   img_size=16, patch_size=4, in_chans=4, embed_dim=32, batch=2
    B, C, H, W = 2, 4, 16, 16
    patch_size = 4
    embed_dim = 32

    key = jax.random.PRNGKey(0)
    kx, kw, kb = jax.random.split(key, 3)

    x = jax.random.normal(kx, (B, C, H, W), dtype=jnp.float32)
    weight = jax.random.normal(
        kw, (embed_dim, C, patch_size, patch_size), dtype=jnp.float32) * 0.02
    bias = jax.random.normal(kb, (embed_dim,), dtype=jnp.float32) * 0.02

    # Reference: XLA strided conv (NCHW, stride=patch).
    ref = jax.lax.conv_general_dilated(
        x, weight,
        window_strides=(patch_size, patch_size),
        padding="VALID",
        dimension_numbers=("NCHW", "OIHW", "NCHW"),
    ) + bias.reshape(1, embed_dim, 1, 1)
    ref = jax.block_until_ready(ref)

    Hp, Wp = H // patch_size, W // patch_size

    # f32 MXU operands: exact match to the conv.
    out_f32 = jax.block_until_ready(
        patch_embed2_forward(x, weight, bias, patch_size,
                             compute_dtype=jnp.float32))
    assert out_f32.shape == (B, embed_dim, Hp, Wp), out_f32.shape
    assert jnp.allclose(out_f32, ref, atol=1e-4, rtol=1e-4)

    # Default path: bf16 MXU operands (f32 accumulation), NCHW output.
    out_bf16 = jax.block_until_ready(
        patch_embed2_forward(x, weight, bias, patch_size))
    assert out_bf16.shape == ref.shape and out_bf16.dtype == x.dtype
    assert jnp.allclose(out_bf16, ref, atol=3e-2, rtol=3e-2)

    # Channels-last fast path (skips the NCHW output transpose).
    out_cl = jax.block_until_ready(
        patch_embed2_forward(x, weight, bias, patch_size, channels_last=True))
    assert out_cl.shape == (B, Hp, Wp, embed_dim), out_cl.shape
    assert jnp.allclose(out_cl, jnp.transpose(ref, (0, 2, 3, 1)),
                        atol=3e-2, rtol=3e-2)

    print("KERNEL_OK")
</pallas_src>

<mosaic_0001>
module attributes {stable_mosaic.version = 11 : i64} {
  func.func @_patch_proj_kernel(%arg0: i32, %arg1: i32, %arg2: memref<16x64xf32, #tpu.memory_space<vmem>>, %arg3: memref<64x32xf32, #tpu.memory_space<vmem>>, %arg4: memref<1x32xf32, #tpu.memory_space<vmem>>, %arg5: memref<16x32xf32, #tpu.memory_space<vmem>>) attributes {dimension_semantics = [#tpu.dimension_semantics<parallel>, #tpu.dimension_semantics<parallel>], iteration_bounds = array<i64: 2, 1>, scalar_prefetch = 0 : i64, scratch_operands = 0 : i64, tpu.core_type = #tpu.core_type<tc>, window_params = [{transform_indices = @transform_0, window_bounds = array<i64: 16, 64>}, {pipeline_mode = #tpu.pipeline_mode<synchronous>, transform_indices = @transform_1, window_bounds = array<i64: 64, 32>}, {pipeline_mode = #tpu.pipeline_mode<synchronous>, transform_indices = @transform_2, window_bounds = array<i64: 1, 32>}, {transform_indices = @transform_3, window_bounds = array<i64: 16, 32>}]} {
    %c0 = arith.constant 0 : index
    %c0_0 = arith.constant 0 : index
    %0 = vector.load %arg2[%c0, %c0_0] : memref<16x64xf32, #tpu.memory_space<vmem>>, vector<16x64xf32>
    %c0_1 = arith.constant 0 : index
    %c0_2 = arith.constant 0 : index
    %1 = vector.load %arg3[%c0_1, %c0_2] : memref<64x32xf32, #tpu.memory_space<vmem>>, vector<64x32xf32>
    %cst = arith.constant dense<0.000000e+00> : vector<16x32xf32>
    %2 = tpu.matmul %0, %1, %cst {dimension_numbers = #tpu.dot_dimension_numbers<[1], [0], [0], [1], [0, 0, 1, 1], [], []>} : vector<16x64xf32>, vector<64x32xf32>, vector<16x32xf32> -> vector<16x32xf32>
    %c0_3 = arith.constant 0 : index
    %c0_4 = arith.constant 0 : index
    %3 = vector.load %arg4[%c0_3, %c0_4] : memref<1x32xf32, #tpu.memory_space<vmem>>, vector<1x32xf32>
    %4 = vector.broadcast %3 : vector<1x32xf32> to vector<16x32xf32>
    %5 = arith.addf %2, %4 : vector<16x32xf32>
    %c0_5 = arith.constant 0 : index
    %c0_6 = arith.constant 0 : index
    %6 = vector.load %arg5[%c0_5, %c0_6] : memref<16x32xf32, #tpu.memory_space<vmem>>, vector<16x32xf32>
    tpu.vector_store %arg5[%c0_5, %c0_6], %5 {strides = array<i32>} : memref<16x32xf32, #tpu.memory_space<vmem>>, vector<16x32xf32>,
    return
  }
  func.func @transform_0(%arg0: i32, %arg1: i32) -> (i32, i32) {
    %c0_i32 = arith.constant 0 : i32
    %c0_i32_0 = arith.constant 0 : i32
    return %arg0, %c0_i32 : i32, i32
  }
  func.func @transform_1(%arg0: i32, %arg1: i32) -> (i32, i32) {
    %c0_i32 = arith.constant 0 : i32
    %c0_i32_0 = arith.constant 0 : i32
    return %c0_i32, %arg1 : i32, i32
  }
  func.func @transform_2(%arg0: i32, %arg1: i32) -> (i32, i32) {
    %c0_i32 = arith.constant 0 : i32
    %c0_i32_0 = arith.constant 0 : i32
    return %c0_i32, %arg1 : i32, i32
  }
  func.func @transform_3(%arg0: i32, %arg1: i32) -> (i32, i32) {
    %c0_i32 = arith.constant 0 : i32
    return %arg0, %arg1 : i32, i32
  }
}

</mosaic_0001>

<llo_original>
// kernel: tpu_custom_call.1
$region0: #{tpu_custom_call.1}
  #allocation0 [shape = 'u32[]', space=smem, size = 0x4, offset = 0x4, fixed_abs, tag = 'smem constant byte address 0x4 - core index']
  #allocation1 [shape = 'u32[72,128]{1,0:T(1,128)}', space=vmem, size = 0x9000, scoped, tag = 'internal scratch']
  %s0 = inlined_call_operand.vmem [shape: f32[32,64], index: 0, kind: input, shape index: {}]
  %s1 = inlined_call_operand.vmem [shape: f32[64,32], index: 1, kind: input, shape index: {}]
  %s2 = inlined_call_operand.vmem [shape: f32[1,32], index: 2, kind: input, shape index: {}]
  %s3 = inlined_call_operand.hbm [shape: f32[32,32], index: 3, kind: output, shape index: {}]
  %s4 = sld [smem:[#allocation0]]
  $region45: #{tpu_custom_call.1} parent=0
    _
  %s6 = ssub.s32 1, %s4
  %s7 = scalar_select 0, %s6, %s4
  $region1: #{tpu_custom_call.1} parent=0
    #allocation2 [shape = 'u8[16384]{0}', space=vmem, size = 0x4000, scoped, tag = 'output window, operand 0']
    #allocation3 [shape = 's32[2]{0}', space=sflag, size = 0x8, scoped, tag = 'scoped memory for tpu_custom_call.1']
    %8 = vsyncpa [#allocation3], 0
    %s9 = scalar_lea.sflag [#allocation3], 1
    %10 = vsyncpa %s9, 0
    loop: start=0, step=1, limit=4
    $region2: #{tpu_custom_call.1} parent=1 // loop_pre_header
      _
    $region3: #{tpu_custom_call.1} parent=1 // loop_header
      %s12 = sphi 0, %s16
      %p13 = scmp.ge.s32.totalorder %s12, 4
      %s19 = sphi 0, %s31
      %s20 = sphi 0, %s27
      %s21 = sphi 0, %s19
      %s22 = sphi 0, %s20
      %s23 = sphi 0, %s21
      %s24 = sphi 0, %s22
      %s34 = sphi 0, %s36
      %s37 = sphi 0, %s34
      %s38 = sphi 0, %s37
      %s54 = sphi 0, %s38
      %s60 = sphi 0, %s62
      %s63 = sphi 0, %s60
      %s64 = sphi 0, %s63
      %s80 = sphi 0, %s64
      %s86 = sphi 0, %s88
      %s89 = sphi 0, %s86
      %s90 = sphi 0, %s89
      %s106 = sphi 0, %s90
      %s114 = sphi 0, %s116
      %s117 = sphi 0, %s114
      %s118 = sphi 0, %s117
      %s134 = sphi 0, %s118
    $region4: #{tpu_custom_call.1} parent=1 // loop_header_branch
      %15 = sbr.rel (%p13) target = $region8
    $region5: #{tpu_custom_call.1} parent=1 // loop_body
      %s17 = ssub.s32 %s12, 1
      %s18 = ssub.s32 %s12, 2
      %s25 = sadd.s32 1, %s20
      %p26 = scmp.ge.s32.totalorder %s25, 1
      %s27 = scalar_select %p26, 0, %s25
      %s28 = sadd.s32 1, %s19
      %s29 = scalar_select %p26, %s28, %s19
      %p30 = scmp.ge.s32.totalorder %s29, 2
      %s31 = scalar_select %p30, 0, %s29
      %s32 = ssub.s32 %s19, %s31
      %p33 = scmp.eq.s32.totalorder %s32, 0
      %s35 = sadd.s32 %s34, 1
      %s36 = scalar_select %p33, %s34, %s35
      %p39 = pneg %p33
      %p40 = scmp.eq.s32.totalorder %s12, 1
      %p41 = por %p39, %p40
      %p42 = scmp.ne.s32.totalorder %s34, %s37
      %p43 = scmp.eq.s32.totalorder %s12, 0
      %p44 = por %p42, %p43
      %p45 = scmp.ne.s32.totalorder %s34, %s37
      %p46 = scmp.eq.s32.totalorder %s17, 1
      %p47 = por %p45, %p46
      %p48 = scmp.ne.s32.totalorder %s37, %s38
      %p49 = scmp.eq.s32.totalorder %s17, 0
      %p50 = por %p48, %p49
      %p51 = scmp.ne.s32.totalorder %s37, %s38
      %p52 = scmp.eq.s32.totalorder %s18, 1
      %p53 = por %p51, %p52
      %p55 = scmp.ne.s32.totalorder %s38, %s54
      %p56 = scmp.eq.s32.totalorder %s18, 0
      %p57 = por %p55, %p56
      %s58 = ssub.s32 %s20, %s27
      %p59 = scmp.eq.s32.totalorder %s58, 0
      %s61 = sadd.s32 %s60, 1
      %s62 = scalar_select %p59, %s60, %s61
      %p65 = pneg %p59
      %p66 = scmp.eq.s32.totalorder %s12, 1
      %p67 = por %p65, %p66
      %p68 = scmp.ne.s32.totalorder %s60, %s63
      %p69 = scmp.eq.s32.totalorder %s12, 0
      %p70 = por %p68, %p69
      %p71 = scmp.ne.s32.totalorder %s60, %s63
      %p72 = scmp.eq.s32.totalorder %s17, 1
      %p73 = por %p71, %p72
      %p74 = scmp.ne.s32.totalorder %s63, %s64
      %p75 = scmp.eq.s32.totalorder %s17, 0
      %p76 = por %p74, %p75
      %p77 = scmp.ne.s32.totalorder %s63, %s64
      %p78 = scmp.eq.s32.totalorder %s18, 1
      %p79 = por %p77, %p78
      %p81 = scmp.ne.s32.totalorder %s64, %s80
      %p82 = scmp.eq.s32.totalorder %s18, 0
      %p83 = por %p81, %p82
      %s84 = ssub.s32 %s20, %s27
      %p85 = scmp.eq.s32.totalorder %s84, 0
      %s87 = sadd.s32 %s86, 1
      %s88 = scalar_select %p85, %s86, %s87
      %p91 = pneg %p85
      %p92 = scmp.eq.s32.totalorder %s12, 1
      %p93 = por %p91, %p92
      %p94 = scmp.ne.s32.totalorder %s86, %s89
      %p95 = scmp.eq.s32.totalorder %s12, 0
      %p96 = por %p94, %p95
      %p97 = scmp.ne.s32.totalorder %s86, %s89
      %p98 = scmp.eq.s32.totalorder %s17, 1
      %p99 = por %p97, %p98
      %p100 = scmp.ne.s32.totalorder %s89, %s90
      %p101 = scmp.eq.s32.totalorder %s17, 0
      %p102 = por %p100, %p101
      %p103 = scmp.ne.s32.totalorder %s89, %s90
      %p104 = scmp.eq.s32.totalorder %s18, 1
      %p105 = por %p103, %p104
      %p107 = scmp.ne.s32.totalorder %s90, %s106
      %p108 = scmp.eq.s32.totalorder %s18, 0
      %p109 = por %p107, %p108
      %s110 = ssub.s32 %s19, %s31
      %s111 = ssub.s32 %s20, %s27
      %s112 = sor.u32 %s110, %s111
      %p113 = scmp.eq.s32.totalorder %s112, 0
      %s115 = sadd.s32 %s114, 1
      %s116 = scalar_select %p113, %s114, %s115
      %p119 = pneg %p113
      %p120 = scmp.eq.s32.totalorder %s12, 1
      %p121 = por %p119, %p120
      %p122 = scmp.ne.s32.totalorder %s114, %s117
      %p123 = scmp.eq.s32.totalorder %s12, 0
      %p124 = por %p122, %p123
      %p125 = scmp.ne.s32.totalorder %s114, %s117
      %p126 = scmp.eq.s32.totalorder %s17, 1
      %p127 = por %p125, %p126
      %p128 = scmp.ne.s32.totalorder %s117, %s118
      %p129 = scmp.eq.s32.totalorder %s17, 0
      %p130 = por %p128, %p129
      %p131 = scmp.ne.s32.totalorder %s117, %s118
      %p132 = scmp.eq.s32.totalorder %s18, 1
      %p133 = por %p131, %p132
      %p135 = scmp.ne.s32.totalorder %s118, %s134
      %p136 = scmp.eq.s32.totalorder %s18, 0
      %p137 = por %p135, %p136
      %p138 = scmp.le.s32.totalorder 1, %s12
      %p139 = scmp.lt.s32.totalorder %s12, 3
      %p140 = pnand %p138, %p139
      %p141 = pneg %p140
      // Predicated region
      $region9: #{tpu_custom_call.1} parent=5 // pred_check
        _
      $region10: #{tpu_custom_call.1} parent=5 // pred_check_branch
        %143 = sbr.rel (%p140) target = $region12
      $region11: #{tpu_custom_call.1} parent=5 // pred_region
        %s144 = ssub.s32 %s12, 1
        // Predicated region
        $region13: #{tpu_custom_call.1} parent=11 // pred_check
          %p145 = pneg %p76
        $region14: #{tpu_custom_call.1} parent=11 // pred_check_branch
          %147 = sbr.rel (%p145) target = $region16
        $region15: #{tpu_custom_call.1} parent=11 // pred_region
          %p148 = scmp.lt.s32.totalorder %s22, 0
          %s149 = scalar_select %p148, %s22, 0
          %s150 = smul.addr %s149, 8
          %s151 = scalar_lea.vmem %s1, %s150
        $region16: #{tpu_custom_call.1} parent=11 // pred_fallthru
          _
        // Predicated region
        $region17: #{tpu_custom_call.1} parent=11 // pred_check
          %p152 = pneg %p102
        $region18: #{tpu_custom_call.1} parent=11 // pred_check_branch
          %154 = sbr.rel (%p152) target = $region20
        $region19: #{tpu_custom_call.1} parent=11 // pred_region
          %p155 = scmp.lt.s32.totalorder %s22, 0
          %s156 = scalar_select %p155, %s22, 0
          %s157 = scalar_lea.vmem %s2, %s156
        $region20: #{tpu_custom_call.1} parent=11 // pred_fallthru
          _
      $region12: #{tpu_custom_call.1} parent=5 // pred_fallthru
        _
      %p158 = scmp.lt.s32.totalorder %s12, 2
      // Predicated region
      $region21: #{tpu_custom_call.1} parent=5 // pred_check
        %p159 = pneg %p158
      $region22: #{tpu_custom_call.1} parent=5 // pred_check_branch
        %161 = sbr.rel (%p159) target = $region24
      $region23: #{tpu_custom_call.1} parent=5 // pred_region
        // Predicated region
        $region25: #{tpu_custom_call.1} parent=23 // pred_check
          %p162 = pneg %p44
        $region26: #{tpu_custom_call.1} parent=23 // pred_check_branch
          %164 = sbr.rel (%p162) target = $region28
        $region27: #{tpu_custom_call.1} parent=23 // pred_region
          %s165 = smul.u32 2, %s19
          %p166 = scmp.lt.s32.totalorder %s165, 3
          %s167 = scalar_select %p166, %s165, 3
          %s168 = smul.addr %s167, 8
          %s169 = scalar_lea.vmem %s0, %s168
          %s170 = smul.u32 2, %s19
        $region28: #{tpu_custom_call.1} parent=23 // pred_fallthru
          _
      $region24: #{tpu_custom_call.1} parent=5 // pred_fallthru
        _
      %p171 = scmp.le.s32.totalorder 1, %s12
      %p172 = scmp.lt.s32.totalorder %s12, 3
      %p173 = pnand %p171, %p172
      %p174 = pneg %p173
      // Predicated region
      $region29: #{tpu_custom_call.1} parent=5 // pred_check
        _
      $region30: #{tpu_custom_call.1} parent=5 // pred_check_branch
        %176 = sbr.rel (%p173) target = $region32
      $region31: #{tpu_custom_call.1} parent=5 // pred_region
        %s177 = ssub.s32 %s12, 1
        %s178 = smul.u32 2, %s21
        %p179 = scmp.lt.s32.totalorder %s178, 3
        %s180 = scalar_select %p179, %s178, 3
        %s181 = smul.addr %s180, 8
        %s182 = scalar_lea.vmem %s0, %s181
        %p183 = pneg %p50
        %p184 = pneg %p47
        %p185 = scmp.lt.s32.totalorder %s22, 0
        %s186 = scalar_select %p185, %s22, 0
        %s187 = smul.addr %s186, 8
        %s188 = scalar_lea.vmem %s1, %s187
        %p189 = pneg %p76
        %p190 = pneg %p73
        %p191 = scmp.lt.s32.totalorder %s22, 0
        %s192 = scalar_select %p191, %s22, 0
        %s193 = scalar_lea.vmem %s2, %s192
        %p194 = pneg %p102
        %p195 = pneg %p99
        %p196 = pneg %p130
        %p197 = pneg %p127
        %s198 = sand.u32 %s117, 1
        %s199 = scalar_lea.sflag [#allocation3], %s198
        %s200 = sand.u32 %s117, 1
        %s201 = smul.addr %s200, 16
        %s202 = scalar_lea.vmem [#allocation2], %s201
        %s203 = smul.u32 2, %s21
        %p204 = scmp.lt.s32.totalorder %s203, 3
        %s205 = scalar_select %p204, %s203, 3
        %s206 = smul.addr %s205, 8
        %s207 = scalar_lea.vmem %s0, %s206
        %s208 = smul.u32 2, %s21
        %p209 = scmp.lt.s32.totalorder %s22, 0
        %s210 = scalar_select %p209, %s22, 0
        %s211 = smul.addr %s210, 8
        %s212 = scalar_lea.vmem %s1, %s211
        %p213 = scmp.lt.s32.totalorder %s22, 0
        %s214 = scalar_select %p213, %s22, 0
        %s215 = scalar_lea.vmem %s2, %s214
        %s216 = smul.u32 2, %s21
        %v217 = vld [vmem:[%s207] sm:$0xff]
        %v218 = vld [vmem:[%s207 + $0x8] sm:$0xff]
        %v219 = vld [vmem:[%s212] sm:$0xff]
        %v220 = vld [vmem:[%s212 + $0x8] sm:$0xff]
        %v221 = vld [vmem:[%s212 + $0x10] sm:$0xff]
        %v222 = vld [vmem:[%s212 + $0x18] sm:$0xff]
        %v223 = vld [vmem:[%s212 + $0x20] sm:$0xff]
        %v224 = vld [vmem:[%s212 + $0x28] sm:$0xff]
        %v225 = vld [vmem:[%s212 + $0x30] sm:$0xff]
        %v226 = vld [vmem:[%s212 + $0x38] sm:$0xff]
        %v227 = vld [vmem:[%s215] sm:$0x1]
        %v229 = vperm.slane %v227, 0
        %vm231 = vcmask 523264
        %v233 = vsel %vm231, %v217, 0
        %v236 = vsel %vm231, %v218, 0
        %238 = vmatpush.msra.mxu0 0.0
        %239 = vmatpush.msra.mxu0 0.0
        %240 = vmatpush.msra.mxu0 0.0
        %241 = vmatpush.msra.mxu0 0.0
        %242 = vmatpush.msra.mxu0 0.0
        %243 = vmatpush.msra.mxu0 0.0
        %244 = vmatpush.msra.mxu0 0.0
        %245 = vmatpush.msra.mxu0 0.0
        %246 = vmatpush.msra.mxu0 %v226
        %247 = vmatpush.msra.mxu0 %v225
        %248 = vmatpush.msra.mxu0 %v224
        %249 = vmatpush.msra.mxu0 %v223
        %250 = vmatpush.msra.mxu0 %v222
        %251 = vmatpush.msra.mxu0 %v221
        %252 = vmatpush.msra.mxu0 %v220
        %253 = vmatpush.msra.mxu0 %v219
        %254 = vmatmul.f32.gmra.mxu0 %v233
        %v255 = vpop.f32.mrf.mxu0
        %v256 = vadd.f32 %v229, %v255
        %257 = vmatmul.f32.gmra.mxu0 %v236
        %v258 = vpop.f32.mrf.mxu0
        %v259 = vadd.f32 %v229, %v258
        %260 = vdwg.mxu0
        %vm261 = vcmask 261120
        %262 = vst.msk [vmem:[%s202] sm:$0xff] %vm261, %v256
        %263 = vst.msk [vmem:[%s202 + $0x8] sm:$0xff] %vm261, %v259
        %s264 = sand.u32 %s117, 1
        %s265 = scalar_lea.sflag [#allocation3], %s264
        %s266 = sand.u32 %s117, 1
        %s267 = smul.addr %s266, 16
        %s268 = scalar_lea.vmem [#allocation2], %s267
        // Predicated region
        $region33: #{tpu_custom_call.1} parent=31 // pred_check
          %p269 = pneg %p127
        $region34: #{tpu_custom_call.1} parent=31 // pred_check_branch
          %271 = sbr.rel (%p269) target = $region36
        $region35: #{tpu_custom_call.1} parent=31 // pred_region
          %s272 = smul.u32 2, %s21
          %274 = vsyncadd %s265, 0
          %s275 = sadd.s32 %s22, %s272
          %s276 = smul.addr %s275, 8
          %s277 = scalar_lea.hbm %s3, %s276
          %s278 = sshll.u32 %s268, 4
          %s279 = int_to_ptr.vmem [resolvable:$true] %s278
          %s280 = sshll.u32 %s277, 4
          %s281 = int_to_ptr.hbm [resolvable:$true] %s280
          %286 = dma.vmem_to_hbm [thread:$0]  %s279, 256, %s281, %s265, 128, 128, 8
        $region36: #{tpu_custom_call.1} parent=31 // pred_fallthru
          _
      $region32: #{tpu_custom_call.1} parent=5 // pred_fallthru
        _
      %p287 = scmp.le.s32.totalorder 2, %s12
      // Predicated region
      $region37: #{tpu_custom_call.1} parent=5 // pred_check
        %p288 = pneg %p287
      $region38: #{tpu_custom_call.1} parent=5 // pred_check_branch
        %290 = sbr.rel (%p288) target = $region40
      $region39: #{tpu_custom_call.1} parent=5 // pred_region
        %s291 = ssub.s32 %s12, 2
        // Predicated region
        $region41: #{tpu_custom_call.1} parent=39 // pred_check
          %p292 = pneg %p133
        $region42: #{tpu_custom_call.1} parent=39 // pred_check_branch
          %294 = sbr.rel (%p292) target = $region44
        $region43: #{tpu_custom_call.1} parent=39 // pred_region
          %s295 = sand.u32 %s118, 1
          %s296 = scalar_lea.sflag [#allocation3], %s295
          %s297 = sand.u32 %s118, 1
          %s298 = smul.addr %s297, 16
          %s299 = scalar_lea.vmem [#allocation2], %s298
          %301 = dma.done %s296, 256
        $region44: #{tpu_custom_call.1} parent=39 // pred_fallthru
          _
      $region40: #{tpu_custom_call.1} parent=5 // pred_fallthru
        _
    $region6: #{tpu_custom_call.1} parent=1 // loop_footer
      %s16 = sadd.s32 1, %s12
    $region7: #{tpu_custom_call.1} parent=1 // loop_footer_branch
      %11 = sbr.rel target = $region3
    $region8: #{tpu_custom_call.1} parent=1 // loop_exit
      _
    %302 = vsyncpa [#allocation3], 1
    %s303 = scalar_lea.sflag [#allocation3], 1
    %304 = vsyncpa %s303, 1

</llo_original>
